<compile_context>
chip_gen: v7x
topology: tpu7x:2x2x1
jax: 0.10.0
libtpu: 0.0.40
codegen_flags: <defaults>
</compile_context>

<pallas_src>
import jax
import jax.numpy as jnp
from jax import lax
from jax.experimental import pallas as pl
from jax.experimental.pallas import tpu as pltpu


def pairwise_eval_kernel(x_ref, w1_ref, w2_ref, b_ref, o_ref):
    """One grid step scores all object pairs of a block of Bb instances.

    x_ref  : [Bb, N, F]  VMEM -- objects of the instances in this block
    w1_ref : [1, F]      VMEM -- weights applied to the first pair member
    w2_ref : [1, F]      VMEM -- weights applied to the second pair member
    b_ref  : [1, 1]      SMEM -- scalar bias of the linear pairwise model
    o_ref  : [Bb, N*N]   VMEM -- flattened pair scores, k = i*N + j (lane-dense)
    """
    _, n, _ = x_ref.shape
    x = x_ref[...]                                      # [Bb, N, F]

    # Rank-1 factorization of the linear pairwise model:
    #   score(concat(x_i, x_j)) = x_i @ w1 + x_j @ w2 + b
    # VPU multiply + short minor-axis reduce (F is tiny).  If the pairwise model
    # ever becomes a real MLP (2F -> H -> 1), restructure as X @ W_top + X @
    # W_bottom with jnp.dot(..., preferred_element_type=f32) so it runs on the
    # MXU per batch block -- still never materializing pairs.
    u = jnp.sum(x * w1_ref[...], axis=-1)               # [Bb, N] first-position utility
    v = jnp.sum(x * w2_ref[...], axis=-1)               # [Bb, N] second-position utility

    # Expand onto the flattened pair axis k = i*N + j:
    #   u must be repeated N times contiguously -> tiny selection matmul (MXU),
    #     which avoids an in-kernel sublane->lane reshape/relayout.
    #   v must be tiled N times along lanes     -> plain lane-axis concatenation.
    k_idx = lax.broadcasted_iota(jnp.int32, (n, n * n), 1)
    i_idx = lax.broadcasted_iota(jnp.int32, (n, n * n), 0)
    e_row = ((k_idx >= i_idx * n) & (k_idx < i_idx * n + n)).astype(jnp.float32)
    u_exp = jnp.dot(u, e_row, preferred_element_type=jnp.float32)    # [Bb, N*N]
    v_exp = jnp.concatenate([v] * n, axis=1)                         # [Bb, N*N]

    o_ref[...] = u_exp + v_exp + b_ref[0, 0]


def _pick_block_b(B, N, F, vmem_budget_bytes):
    """Largest batch block whose double-buffered in+out f32 tiles fit the budget."""
    per_instance_bytes = 2 * (N * F + N * N) * 4        # in + out, 2x buffered, f32
    bb = max(1, vmem_budget_bytes // per_instance_bytes)
    return int(min(B, bb))


def pairwise_evaluation(instances, w, b, *, block_b=None,
                        vmem_budget_bytes=8 << 20, vmem_limit_bytes=None):
    """instances: [B, N, F] f32; w: [1, 2F] f32; b: [1, 1] f32 -> [B, N, N] f32."""
    B, N, F = instances.shape
    assert w.shape == (1, 2 * F)
    assert b.shape == (1, 1)

    instances = instances.astype(jnp.float32)
    # Split the pair weights in the wrapper so the kernel never slices at a
    # non-128-aligned boundary (F << 128).
    w = w.astype(jnp.float32)
    w1 = w[:, :F]                                        # first pair member weights
    w2 = w[:, F:]                                        # second pair member weights
    b = b.astype(jnp.float32)

    # Batch-block sizing.  The 8 MiB default budget sits comfortably under every
    # generation's scoped-VMEM default (v5e 16 MiB, v6e/v7x 32 MiB).  On v6e
    # (128 MiB physical) raise vmem_budget_bytes together with vmem_limit_bytes
    # for larger resident blocks; keep them modest on v7x (64 MiB physical) and
    # v5e (lower HBM bandwidth).
    Bb = block_b if block_b is not None else _pick_block_b(B, N, F, vmem_budget_bytes)
    num_blocks = pl.cdiv(B, Bb)
    B_pad = num_blocks * Bb
    if B_pad != B:
        instances = jnp.pad(instances, ((0, B_pad - B), (0, 0), (0, 0)))

    grid_spec = pltpu.PrefetchScalarGridSpec(
        num_scalar_prefetch=0,
        grid=(num_blocks,),
        in_specs=[
            pl.BlockSpec((Bb, N, F), lambda i: (i, 0, 0)),       # instance block
            pl.BlockSpec((1, F), lambda i: (0, 0)),              # w1 (resident)
            pl.BlockSpec((1, F), lambda i: (0, 0)),              # w2 (resident)
            pl.BlockSpec(memory_space=pltpu.MemorySpace.SMEM),   # scalar bias
        ],
        # Lane-dense output: flat pair axis [B, N*N]; reshaped outside the kernel.
        out_specs=pl.BlockSpec((Bb, N * N), lambda i: (i, 0)),
    )

    out_flat = pl.pallas_call(
        pairwise_eval_kernel,
        out_shape=jax.ShapeDtypeStruct((B_pad, N * N), jnp.float32),
        grid_spec=grid_spec,
        compiler_params=pltpu.CompilerParams(
            # Batch blocks are independent -> lets the two TensorCores of a
            # v7x chip split the grid; harmless on v5e/v6e.
            dimension_semantics=("parallel",),
            vmem_limit_bytes=vmem_limit_bytes,
        ),
    )(instances, w1, w2, b)

    return out_flat[:B].reshape(B, N, N)


def reference(instances, w, b):
    """Pure-JAX replica of the PyTorch forward (for validation)."""
    B, N, F = instances.shape
    first = jnp.repeat(instances, N, axis=1)             # repeat_individual_objects
    second = jnp.tile(instances, (1, N, 1))              # repeat_object_lists
    pairs = jnp.concatenate([first, second], axis=2)     # [B, N*N, 2F]
    scores = pairs @ w[0] + b[0, 0]                      # linear pairwise model
    return scores.reshape(B, N, N)


if __name__ == "__main__":
    key = jax.random.PRNGKey(0)
    B, N, F = 2, 8, 4

    instances = jax.random.normal(key, (B, N, F), dtype=jnp.float32)

    # Deterministic pairwise-model parameters (linear scorer over 2F features).
    w = (jnp.arange(1, 2 * F + 1, dtype=jnp.float32) / (2 * F)).reshape(1, 2 * F)
    b = jnp.array([[0.25]], dtype=jnp.float32)

    out = jax.block_until_ready(pairwise_evaluation(instances, w, b))
    ref = reference(instances, w, b)
    assert out.shape == (B, N, N), out.shape
    assert jnp.allclose(out, ref, atol=1e-5, rtol=1e-5), (out, ref)

    # Also exercise the padded / multi-block grid path (B not divisible by Bb).
    instances3 = jax.random.normal(jax.random.PRNGKey(1), (3, N, F), dtype=jnp.float32)
    out3 = jax.block_until_ready(pairwise_evaluation(instances3, w, b, block_b=2))
    ref3 = reference(instances3, w, b)
    assert out3.shape == (3, N, N), out3.shape
    assert jnp.allclose(out3, ref3, atol=1e-5, rtol=1e-5), (out3, ref3)

    print("KERNEL_OK")
</pallas_src>

<mosaic_0001>
module attributes {stable_mosaic.version = 11 : i64} {
  func.func @pairwise_eval_kernel(%arg0: i32, %arg1: memref<2x8x4xf32, #tpu.memory_space<vmem>>, %arg2: memref<1x4xf32, #tpu.memory_space<vmem>>, %arg3: memref<1x4xf32, #tpu.memory_space<vmem>>, %arg4: memref<1x1xf32, #tpu.memory_space<smem>>, %arg5: memref<2x64xf32, #tpu.memory_space<vmem>>) attributes {dimension_semantics = [#tpu.dimension_semantics<parallel>], iteration_bounds = array<i64: 1>, scalar_prefetch = 0 : i64, scratch_operands = 0 : i64, tpu.core_type = #tpu.core_type<tc>, window_params = [{transform_indices = @transform_0, window_bounds = array<i64: 2, 8, 4>}, {pipeline_mode = #tpu.pipeline_mode<synchronous>, transform_indices = @transform_1, window_bounds = array<i64: 1, 4>}, {pipeline_mode = #tpu.pipeline_mode<synchronous>, transform_indices = @transform_2, window_bounds = array<i64: 1, 4>}, {transform_indices = @transform_3, window_bounds = array<i64: 1, 1>}, {transform_indices = @transform_4, window_bounds = array<i64: 2, 64>}]} {
    %c0 = arith.constant 0 : index
    %c0_0 = arith.constant 0 : index
    %c0_1 = arith.constant 0 : index
    %0 = vector.load %arg1[%c0, %c0_0, %c0_1] : memref<2x8x4xf32, #tpu.memory_space<vmem>>, vector<2x8x4xf32>
    %c0_2 = arith.constant 0 : index
    %c0_3 = arith.constant 0 : index
    %1 = vector.load %arg2[%c0_2, %c0_3] : memref<1x4xf32, #tpu.memory_space<vmem>>, vector<1x4xf32>
    %2 = vector.shape_cast %1 : vector<1x4xf32> to vector<1x1x4xf32>
    %3 = vector.broadcast %2 : vector<1x1x4xf32> to vector<2x8x4xf32>
    %4 = arith.mulf %0, %3 : vector<2x8x4xf32>
    %cst = arith.constant dense<0.000000e+00> : vector<2x8xf32>
    %5 = vector.multi_reduction <add>, %4, %cst [2] : vector<2x8x4xf32> to vector<2x8xf32>
    %c0_4 = arith.constant 0 : index
    %c0_5 = arith.constant 0 : index
    %6 = vector.load %arg3[%c0_4, %c0_5] : memref<1x4xf32, #tpu.memory_space<vmem>>, vector<1x4xf32>
    %7 = vector.shape_cast %6 : vector<1x4xf32> to vector<1x1x4xf32>
    %8 = vector.broadcast %7 : vector<1x1x4xf32> to vector<2x8x4xf32>
    %9 = arith.mulf %0, %8 : vector<2x8x4xf32>
    %cst_6 = arith.constant dense<0.000000e+00> : vector<2x8xf32>
    %10 = vector.multi_reduction <add>, %9, %cst_6 [2] : vector<2x8x4xf32> to vector<2x8xf32>
    %11 = tpu.iota {dimensions = array<i32: 1>} : vector<8x64xi32>
    %12 = tpu.iota {dimensions = array<i32: 0>} : vector<8x64xi32>
    %c8_i32 = arith.constant 8 : i32
    %13 = vector.broadcast %c8_i32 : i32 to vector<8x64xi32>
    %14 = arith.muli %12, %13 : vector<8x64xi32>
    %15 = arith.cmpi sge, %11, %14 : vector<8x64xi32>
    %c8_i32_7 = arith.constant 8 : i32
    %16 = vector.broadcast %c8_i32_7 : i32 to vector<8x64xi32>
    %17 = arith.muli %12, %16 : vector<8x64xi32>
    %c8_i32_8 = arith.constant 8 : i32
    %18 = vector.broadcast %c8_i32_8 : i32 to vector<8x64xi32>
    %19 = arith.addi %17, %18 : vector<8x64xi32>
    %20 = arith.cmpi slt, %11, %19 : vector<8x64xi32>
    %21 = arith.andi %15, %20 : vector<8x64xi1>
    %22 = arith.extui %21 : vector<8x64xi1> to vector<8x64xi32>
    %23 = arith.sitofp %22 : vector<8x64xi32> to vector<8x64xf32>
    %cst_9 = arith.constant dense<0.000000e+00> : vector<2x64xf32>
    %24 = tpu.matmul %5, %23, %cst_9 {dimension_numbers = #tpu.dot_dimension_numbers<[1], [0], [0], [1], [0, 0, 1, 1], [], []>} : vector<2x8xf32>, vector<8x64xf32>, vector<2x64xf32> -> vector<2x64xf32>
    %25 = tpu.concatenate %10, %10, %10, %10, %10, %10, %10, %10 in 1 : vector<2x8xf32>, vector<2x8xf32>, vector<2x8xf32>, vector<2x8xf32>, vector<2x8xf32>, vector<2x8xf32>, vector<2x8xf32>, vector<2x8xf32> -> vector<2x64xf32>
    %26 = arith.addf %24, %25 : vector<2x64xf32>
    %c0_10 = arith.constant 0 : index
    %c0_11 = arith.constant 0 : index
    %27 = memref.load %arg4[%c0_10, %c0_11] : memref<1x1xf32, #tpu.memory_space<smem>>
    %28 = vector.broadcast %27 : f32 to vector<2x64xf32>
    %29 = arith.addf %26, %28 : vector<2x64xf32>
    %c0_12 = arith.constant 0 : index
    %c0_13 = arith.constant 0 : index
    %30 = vector.load %arg5[%c0_12, %c0_13] : memref<2x64xf32, #tpu.memory_space<vmem>>, vector<2x64xf32>
    tpu.vector_store %arg5[%c0_12, %c0_13], %29 {strides = array<i32>} : memref<2x64xf32, #tpu.memory_space<vmem>>, vector<2x64xf32>,
    return
  }
  func.func @transform_0(%arg0: i32) -> (i32, i32, i32) {
    %c0_i32 = arith.constant 0 : i32
    %c0_i32_0 = arith.constant 0 : i32
    %c0_i32_1 = arith.constant 0 : i32
    return %arg0, %c0_i32, %c0_i32_0 : i32, i32, i32
  }
  func.func @transform_1(%arg0: i32) -> (i32, i32) {
    %c0_i32 = arith.constant 0 : i32
    %c0_i32_0 = arith.constant 0 : i32
    %c0_i32_1 = arith.constant 0 : i32
    return %c0_i32, %c0_i32_0 : i32, i32
  }
  func.func @transform_2(%arg0: i32) -> (i32, i32) {
    %c0_i32 = arith.constant 0 : i32
    %c0_i32_0 = arith.constant 0 : i32
    %c0_i32_1 = arith.constant 0 : i32
    return %c0_i32, %c0_i32_0 : i32, i32
  }
  func.func @transform_3(%arg0: i32) -> (i32, i32) {
    %c0_i32 = arith.constant 0 : i32
    %c0_i32_0 = arith.constant 0 : i32
    %c0_i32_1 = arith.constant 0 : i32
    return %c0_i32, %c0_i32_0 : i32, i32
  }
  func.func @transform_4(%arg0: i32) -> (i32, i32) {
    %c0_i32 = arith.constant 0 : i32
    %c0_i32_0 = arith.constant 0 : i32
    return %arg0, %c0_i32 : i32, i32
  }
}

</mosaic_0001>

<llo_original>
// kernel: tpu_custom_call.1
$region0: #{tpu_custom_call.1}
  #allocation0 [shape = 'u32[]', space=smem, size = 0x4, offset = 0x4, fixed_abs, tag = 'smem constant byte address 0x4 - core index']
  #allocation1 [shape = 'u32[144,128]{1,0:T(1,128)}', space=vmem, size = 0x12000, scoped, tag = 'internal scratch']
  #allocation2 [shape = 'f32[1,1]{1,0:T(1,128)S(6)}', space=smem, size = 0x200, scoped, tag = 'scoped memory for tpu_custom_call.1']
  %s0 = inlined_call_operand.vmem [shape: f32[2,8,4], index: 0, kind: input, shape index: {}]
  %s1 = inlined_call_operand.vmem [shape: f32[1,4], index: 1, kind: input, shape index: {}]
  %s2 = inlined_call_operand.vmem [shape: f32[1,4], index: 2, kind: input, shape index: {}]
  %s3 = inlined_call_operand.<no memory space> [shape: f32[1,1], index: 3, kind: input, shape index: {}]
  %s4 = inlined_call_operand.hbm [shape: f32[2,64], index: 4, kind: output, shape index: {}]
  %s5 = sld [smem:[#allocation0]]
  $region26: #{tpu_custom_call.1} parent=0
    _
  %s7 = ssub.s32 1, %s5
  %s8 = scalar_select 0, %s7, %s5
  %9 = sst [smem:[#allocation2]] %s3
  $region1: #{tpu_custom_call.1} parent=0
    #allocation3 [shape = 'u8[1024]{0}', space=vmem, size = 0x400, scoped, tag = 'output window, operand 0, single buffered']
    #allocation4 [shape = 's32[1]{0}', space=sflag, size = 0x4, scoped, tag = 'scoped memory for tpu_custom_call.1']
    %10 = vsyncpa [#allocation4], 0
    // Predicated region
    $region2: #{tpu_custom_call.1} parent=1 // pred_check
      _
    $region3: #{tpu_custom_call.1} parent=1 // pred_check_branch
      %12 = sbr.rel (0) target = $region5
    $region4: #{tpu_custom_call.1} parent=1 // pred_region
      _
    $region5: #{tpu_custom_call.1} parent=1 // pred_fallthru
      _
    // Predicated region
    $region6: #{tpu_custom_call.1} parent=1 // pred_check
      _
    $region7: #{tpu_custom_call.1} parent=1 // pred_check_branch
      %14 = sbr.rel (0) target = $region9
    $region8: #{tpu_custom_call.1} parent=1 // pred_region
      _
    $region9: #{tpu_custom_call.1} parent=1 // pred_fallthru
      _
    // Predicated region
    $region10: #{tpu_custom_call.1} parent=1 // pred_check
      _
    $region11: #{tpu_custom_call.1} parent=1 // pred_check_branch
      %16 = sbr.rel (0) target = $region13
    $region12: #{tpu_custom_call.1} parent=1 // pred_region
      _
    $region13: #{tpu_custom_call.1} parent=1 // pred_fallthru
      _
    // Predicated region
    $region14: #{tpu_custom_call.1} parent=1 // pred_check
      _
    $region15: #{tpu_custom_call.1} parent=1 // pred_check_branch
      %18 = sbr.rel (0) target = $region17
    $region16: #{tpu_custom_call.1} parent=1 // pred_region
      _
    $region17: #{tpu_custom_call.1} parent=1 // pred_fallthru
      _
    %v19 = vld [vmem:[%s0] sm:$0xff]
    %v20 = vld [vmem:[%s0 + $0x8] sm:$0xff]
    %v21 = vld [vmem:[%s1] sm:$0x1]
    %v23 = vlaneseq
    %v24 = vshrl.u32 %v23, 7
    %v25 = vsub.s32 0, %v24
    %v26 = vrot.slane %v21, %v25
    %v28 = vmul.f32 %v19, %v26
    %v29 = vmul.f32 %v20, %v26
    %vm30 = vcmask 31744
    %v31 = vsel %vm30, %v28, 0.0
    %32 = vadd.xlane.f32.xlu0 %v31
    %v33 = vpop.xlane.xlu0 %32
    %v34 = vsel %vm30, %v29, 0.0
    %35 = vadd.xlane.f32.xlu0 %v34
    %v36 = vpop.xlane.xlu0 %35
    %v37 = vld [vmem:[%s2] sm:$0x1]
    %v39 = vlaneseq
    %v40 = vshrl.u32 %v39, 7
    %v41 = vsub.s32 0, %v40
    %v42 = vrot.slane %v37, %v41
    %v44 = vmul.f32 %v19, %v42
    %v45 = vmul.f32 %v20, %v42
    %v46 = vsel %vm30, %v44, 0.0
    %47 = vadd.xlane.f32.xlu0 %v46
    %v48 = vpop.xlane.xlu0 %47
    %v49 = vsel %vm30, %v45, 0.0
    %50 = vadd.xlane.f32.xlu0 %v49
    %v51 = vpop.xlane.xlu0 %50
    %v52 = vlaneseq
    %v53 = vand.u32 %v52, 127
    %v54 = vlaneseq
    %v55 = vshrl.u32 %v54, 7
    %v56 = vmul.u32 %v55, 8
    %vm57 = vcmp.ge.s32.totalorder %v53, %v56
    %v58 = vadd.s32 %v56, 8
    %vm59 = vcmp.lt.s32.totalorder %v53, %v58
    %vm60 = vmand %vm57, %vm59
    %v61 = vsel %vm60, 1, 0
    %v62 = vcvt.s32.f32 %v61
    %v65 = vlaneseq
    %v66 = vshrl.u32 %v65, 7
    %v67 = vsub.s32 %v53, %v66
    %v68 = vrot.slane %v48, %v67
    %v69 = vlaneseq
    %v70 = vshrl.u32 %v69, 7
    %v71 = vsub.s32 %v53, %v70
    %v72 = vrot.slane %v51, %v71
    %vm73 = vcmask 1041409
    %v74 = vsel %vm73, %v72, %v68
    %v76 = vadd.s32 %v53, 4294967288
    %v77 = vlaneseq
    %v78 = vshrl.u32 %v77, 7
    %v79 = vsub.s32 %v76, %v78
    %v80 = vrot.slane %v48, %v79
    %v81 = vlaneseq
    %v82 = vshrl.u32 %v81, 7
    %v83 = vsub.s32 %v76, %v82
    %v84 = vrot.slane %v51, %v83
    %v85 = vsel %vm73, %v84, %v80
    %v87 = vadd.s32 %v53, 4294967280
    %v88 = vlaneseq
    %v89 = vshrl.u32 %v88, 7
    %v90 = vsub.s32 %v87, %v89
    %v91 = vrot.slane %v48, %v90
    %v92 = vlaneseq
    %v93 = vshrl.u32 %v92, 7
    %v94 = vsub.s32 %v87, %v93
    %v95 = vrot.slane %v51, %v94
    %v96 = vsel %vm73, %v95, %v91
    %v98 = vadd.s32 %v53, 4294967272
    %v99 = vlaneseq
    %v100 = vshrl.u32 %v99, 7
    %v101 = vsub.s32 %v98, %v100
    %v102 = vrot.slane %v48, %v101
    %v103 = vlaneseq
    %v104 = vshrl.u32 %v103, 7
    %v105 = vsub.s32 %v98, %v104
    %v106 = vrot.slane %v51, %v105
    %v107 = vsel %vm73, %v106, %v102
    %v109 = vadd.s32 %v53, 4294967264
    %v110 = vlaneseq
    %v111 = vshrl.u32 %v110, 7
    %v112 = vsub.s32 %v109, %v111
    %v113 = vrot.slane %v48, %v112
    %v114 = vlaneseq
    %v115 = vshrl.u32 %v114, 7
    %v116 = vsub.s32 %v109, %v115
    %v117 = vrot.slane %v51, %v116
    %v118 = vsel %vm73, %v117, %v113
    %v120 = vadd.s32 %v53, 4294967256
    %v121 = vlaneseq
    %v122 = vshrl.u32 %v121, 7
    %v123 = vsub.s32 %v120, %v122
    %v124 = vrot.slane %v48, %v123
    %v125 = vlaneseq
    %v126 = vshrl.u32 %v125, 7
    %v127 = vsub.s32 %v120, %v126
    %v128 = vrot.slane %v51, %v127
    %v129 = vsel %vm73, %v128, %v124
    %v131 = vadd.s32 %v53, 4294967248
    %v132 = vlaneseq
    %v133 = vshrl.u32 %v132, 7
    %v134 = vsub.s32 %v131, %v133
    %v135 = vrot.slane %v48, %v134
    %v136 = vlaneseq
    %v137 = vshrl.u32 %v136, 7
    %v138 = vsub.s32 %v131, %v137
    %v139 = vrot.slane %v51, %v138
    %v140 = vsel %vm73, %v139, %v135
    %v142 = vadd.s32 %v53, 4294967240
    %v143 = vlaneseq
    %v144 = vshrl.u32 %v143, 7
    %v145 = vsub.s32 %v142, %v144
    %v146 = vrot.slane %v48, %v145
    %v147 = vlaneseq
    %v148 = vshrl.u32 %v147, 7
    %v149 = vsub.s32 %v142, %v148
    %v150 = vrot.slane %v51, %v149
    %v151 = vsel %vm73, %v150, %v146
    %vm153 = vcmask 64512
    %v154 = vsel %vm153, %v74, %v85
    %vm155 = vcmask 130048
    %v156 = vsel %vm155, %v154, %v96
    %vm157 = vcmask 195584
    %v158 = vsel %vm157, %v156, %v107
    %vm159 = vcmask 261120
    %v160 = vsel %vm159, %v158, %v118
    %vm161 = vcmask 326656
    %v162 = vsel %vm161, %v160, %v129
    %vm163 = vcmask 392192
    %v164 = vsel %vm163, %v162, %v140
    %vm165 = vcmask 457728
    %v166 = vsel %vm165, %v164, %v151
    %v169 = vlaneseq
    %v170 = vshrl.u32 %v169, 7
    %v171 = vsub.s32 %v53, %v170
    %v172 = vrot.slane %v33, %v171
    %v173 = vlaneseq
    %v174 = vshrl.u32 %v173, 7
    %v175 = vsub.s32 %v53, %v174
    %v176 = vrot.slane %v36, %v175
    %v177 = vsel %vm73, %v176, %v172
    %v178 = vsel %vm153, %v177, 0
    %180 = vmatprep.subr.mxu0 0.0
    %181 = vmatpush1.msra.mxu0 %v62
    %182 = vmatprep.subr.mxu0 0.0
    %183 = vmatpush1.msra.mxu0 0.0
    %184 = vmatprep.subr.mxu0 0.0
    %185 = vmatpush1.msra.mxu0 0.0
    %186 = vmatprep.subr.mxu0 0.0
    %187 = vmatpush1.msra.mxu0 0.0
    %188 = vmatprep.subr.mxu0 0.0
    %189 = vmatpush1.msra.mxu0 0.0
    %190 = vmatprep.subr.mxu0 0.0
    %191 = vmatpush1.msra.mxu0 0.0
    %192 = vmatprep.subr.mxu0 0.0
    %193 = vmatpush1.msra.mxu0 0.0
    %194 = vmatprep.subr.mxu0 0.0
    %195 = vmatpush1.msra.mxu0 0.0
    %196 = vmatprep.subr.mxu0 0.0
    %197 = vmatpush1.msra.mxu0 0.0
    %198 = vmatprep.subr.mxu0 0.0
    %199 = vmatpush1.msra.mxu0 0.0
    %200 = vmatprep.subr.mxu0 0.0
    %201 = vmatpush1.msra.mxu0 0.0
    %202 = vmatprep.subr.mxu0 0.0
    %203 = vmatpush1.msra.mxu0 0.0
    %204 = vmatprep.subr.mxu0 0.0
    %205 = vmatpush1.msra.mxu0 0.0
    %206 = vmatprep.subr.mxu0 0.0
    %207 = vmatpush1.msra.mxu0 0.0
    %208 = vmatprep.subr.mxu0 0.0
    %209 = vmatpush1.msra.mxu0 0.0
    %210 = vmatprep.subr.mxu0 0.0
    %211 = vmatpush1.msra.mxu0 0.0
    %212 = vmatprep.subr.mxu0 0.0
    %213 = vmatpush1.msra.mxu0 0.0
    %214 = vmatprep.subr.mxu0 0.0
    %215 = vmatpush1.msra.mxu0 0.0
    %216 = vmatprep.subr.mxu0 0.0
    %217 = vmatpush1.msra.mxu0 0.0
    %218 = vmatprep.subr.mxu0 0.0
    %219 = vmatpush1.msra.mxu0 0.0
    %220 = vmatprep.subr.mxu0 0.0
    %221 = vmatpush1.msra.mxu0 0.0
    %222 = vmatprep.subr.mxu0 0.0
    %223 = vmatpush1.msra.mxu0 0.0
    %224 = vmatprep.subr.mxu0 0.0
    %225 = vmatpush1.msra.mxu0 0.0
    %226 = vmatprep.subr.mxu0 0.0
    %227 = vmatpush1.msra.mxu0 0.0
    %228 = vmatprep.subr.mxu0 0.0
    %229 = vmatpush1.msra.mxu0 0.0
    %230 = vmatprep.subr.mxu0 0.0
    %231 = vmatpush1.msra.mxu0 0.0
    %232 = vmatprep.subr.mxu0 0.0
    %233 = vmatpush1.msra.mxu0 0.0
    %234 = vmatprep.subr.mxu0 0.0
    %235 = vmatpush1.msra.mxu0 0.0
    %236 = vmatprep.subr.mxu0 0.0
    %237 = vmatpush1.msra.mxu0 0.0
    %238 = vmatprep.subr.mxu0 0.0
    %239 = vmatpush1.msra.mxu0 0.0
    %240 = vmatprep.subr.mxu0 0.0
    %241 = vmatpush1.msra.mxu0 0.0
    %242 = vmatprep.subr.mxu0 0.0
    %243 = vmatpush1.msra.mxu0 0.0
    %244 = vmatprep.mubr.f32.mxu0 0.0
    %245 = vmatmul.mubr.f32.gmra.mrb[0].mxu0 %v178
    %v246 = vpop.f32.mrb[0].mxu0
    %v247 = vadd.f32 %v166, %v246
    %v248 = vpop.f32.mrb[0].mxu0
    %249 = vdwg.mxu0
    %s250 = sld [smem:[#allocation2]]
    %v251 = vstv %s250
    %v252 = vadd.f32 %v247, %v251
    %vm253 = vcmask 517120
    %254 = vst.msk [vmem:[#allocation3] sm:$0x3] %vm253, %v252
    // Predicated region
    $region18: #{tpu_custom_call.1} parent=1 // pred_check
      _
    $region19: #{tpu_custom_call.1} parent=1 // pred_check_branch
      %256 = sbr.rel (0) target = $region21
    $region20: #{tpu_custom_call.1} parent=1 // pred_region
      %s258 = ssub.s32 32, 32
      %259 = vsyncadd [#allocation4], %s258
      %s261 = sshll.u32 [#allocation3], 4
      %s262 = int_to_ptr.vmem [resolvable:$true] %s261
      %264 = dma.vmem_to_hbm [thread:$0]  %s262, 32, %s4, [#allocation4]
    $region21: #{tpu_custom_call.1} parent=1 // pred_fallthru
      _
    // Predicated region
    $region22: #{tpu_custom_call.1} parent=1 // pred_check
      _
    $region23: #{tpu_custom_call.1} parent=1 // pred_check_branch
      %266 = sbr.rel (0) target = $region25
    $region24: #{tpu_custom_call.1} parent=1 // pred_region
      %267 = dma.done [#allocation4], 32
    $region25: #{tpu_custom_call.1} parent=1 // pred_fallthru
      _
    %268 = vsyncpa [#allocation4], 1

</llo_original>
